<compile_context>
chip_gen: v7x
topology: tpu7x:2x2x1
jax: 0.10.0
libtpu: 0.0.40
codegen_flags: <defaults>
</compile_context>

<pallas_src>
import functools

import jax
import jax.numpy as jnp
from jax import lax
from jax.experimental import pallas as pl
from jax.experimental.pallas import tpu as pltpu

_EPS = 1e-12  # F.normalize default eps


def _isomax_kernel(scale_ref, feat_ref, proto_ref, out_ref, *, neg_inv_temp):
    # scale_ref: (1,)            SMEM   (distance_scale parameter)
    # feat_ref:  (tm, F_pad)     VMEM   (raw features, this batch tile)
    # proto_ref: (C_pad, F_pad)  VMEM   (pre-normalized prototypes, f32)
    # out_ref:   (tm, C_pad)     VMEM
    f = feat_ref[...].astype(jnp.float32)

    # F.normalize(features): x / max(||x||, eps)  ==  x * rsqrt(max(||x||^2, eps^2))
    sum_sq = jnp.sum(f * f, axis=-1, keepdims=True)            # (tm, 1)
    inv = lax.rsqrt(jnp.maximum(sum_sq, _EPS * _EPS))           # EUP rsqrt
    f_hat = f * inv                                             # (tm, F_pad)
    f_sq = sum_sq * inv * inv                                   # ||f_hat||^2, (tm, 1)

    p_hat = proto_ref[...]                                      # already normalized

    # MXU: s[i, j] = <f_hat_i, p_hat_j>  (contract on feature axis, f32 accumulate)
    s = lax.dot_general(
        f_hat, p_hat,
        dimension_numbers=(((1,), (1,)), ((), ())),
        preferred_element_type=jnp.float32,
    )                                                           # (tm, C_pad)

    # d^2 = ||f_hat||^2 + ||p_hat||^2 - 2 s ; real prototypes have ||p_hat||^2 = 1.
    # Clamp at 0 so rounding near f_hat == p_hat never produces NaN under sqrt.
    d2 = jnp.maximum(f_sq + 1.0 - 2.0 * s, 0.0)
    dist = jnp.sqrt(d2)

    # logits = -(|scale| * dist) / temperature, temperature folded at trace time.
    scale = jnp.abs(scale_ref[0]).astype(jnp.float32) * neg_inv_temp
    out_ref[...] = (scale * dist).astype(out_ref.dtype)


def _round_up(x, m):
    return ((x + m - 1) // m) * m


def isomax_plus_first_part(features, prototypes, distance_scale,
                           temperature=1.0, tm=256):
    """features: (N, F), prototypes: (C, F), distance_scale: (1,) -> logits (N, C)."""
    N, F = features.shape
    C, F2 = prototypes.shape
    assert F == F2, "feature dims must match"

    # Hoisted (once, outside the per-tile kernel body): normalize prototypes.
    p = prototypes.astype(jnp.float32)
    p_sum_sq = jnp.sum(p * p, axis=-1, keepdims=True)
    p_hat = p * lax.rsqrt(jnp.maximum(p_sum_sq, _EPS * _EPS))

    # Lane-dense padding: last dims to multiples of 128, batch tile multiple of 8.
    F_pad = _round_up(max(F, 128), 128)
    C_pad = _round_up(max(C, 128), 128)
    tm = min(tm, _round_up(max(N, 8), 8))
    N_pad = _round_up(N, tm)

    feats = features
    if (N_pad != N) or (F_pad != F):
        feats = jnp.pad(features, ((0, N_pad - N), (0, F_pad - F)))
    if (C_pad != C) or (F_pad != F):
        p_hat = jnp.pad(p_hat, ((0, C_pad - C), (0, F_pad - F)))

    num_tiles = N_pad // tm
    kernel = functools.partial(_isomax_kernel,
                               neg_inv_temp=-1.0 / float(temperature))

    out = pl.pallas_call(
        kernel,
        out_shape=jax.ShapeDtypeStruct((N_pad, C_pad), features.dtype),
        grid_spec=pl.GridSpec(
            grid=(num_tiles,),
            in_specs=[
                pl.BlockSpec(memory_space=pltpu.SMEM),                  # distance_scale
                pl.BlockSpec((tm, F_pad), lambda i: (i, 0)),            # features tile
                pl.BlockSpec((C_pad, F_pad), lambda i: (0, 0)),         # prototypes (resident)
            ],
            out_specs=pl.BlockSpec((tm, C_pad), lambda i: (i, 0)),
        ),
        compiler_params=pltpu.CompilerParams(
            dimension_semantics=("parallel",),
        ),
    )(distance_scale, feats, p_hat)

    # Drop padded rows / padded (zero-prototype) logit columns.
    return out[:N, :C]


def _reference(features, prototypes, distance_scale, temperature=1.0, eps=_EPS):
    f = features.astype(jnp.float32)
    p = prototypes.astype(jnp.float32)
    f_hat = f / jnp.maximum(jnp.linalg.norm(f, axis=-1, keepdims=True), eps)
    p_hat = p / jnp.maximum(jnp.linalg.norm(p, axis=-1, keepdims=True), eps)
    diff = f_hat[:, None, :] - p_hat[None, :, :]
    dist = jnp.sqrt(jnp.sum(diff * diff, axis=-1))
    return -(jnp.abs(distance_scale[0]) * dist) / temperature


if __name__ == "__main__":
    key = jax.random.PRNGKey(0)
    k_feat, k_proto, k_feat2, k_proto2 = jax.random.split(key, 4)

    # --- Case 1: small, matches the module's default usage ----------------
    batch, num_features, num_classes, temperature = 8, 32, 8, 1.0

    # Mirror PyTorch __init__: prototypes ~ N(0,1), distance_scale = 1.0
    prototypes = jax.random.normal(k_proto, (num_classes, num_features), jnp.float32)
    distance_scale = jnp.ones((1,), jnp.float32)
    features = jax.random.normal(k_feat, (batch, num_features), jnp.float32)

    logits = isomax_plus_first_part(features, prototypes, distance_scale, temperature)
    logits = jax.block_until_ready(logits)
    ref = _reference(features, prototypes, distance_scale, temperature)
    assert logits.shape == (batch, num_classes)
    assert jnp.allclose(logits, ref, atol=1e-4, rtol=1e-4), (
        f"case1 max abs err = {jnp.max(jnp.abs(logits - ref))}"
    )

    # --- Case 2: exercises N-tiling + C/F padding + output slicing --------
    batch2, num_features2, num_classes2, temperature2 = 300, 96, 10, 2.0
    prototypes2 = jax.random.normal(k_proto2, (num_classes2, num_features2), jnp.float32)
    distance_scale2 = jnp.array([1.7], jnp.float32)
    features2 = jax.random.normal(k_feat2, (batch2, num_features2), jnp.float32)

    logits2 = isomax_plus_first_part(features2, prototypes2, distance_scale2,
                                     temperature2, tm=128)
    logits2 = jax.block_until_ready(logits2)
    ref2 = _reference(features2, prototypes2, distance_scale2, temperature2)
    assert logits2.shape == (batch2, num_classes2)
    assert jnp.allclose(logits2, ref2, atol=1e-4, rtol=1e-4), (
        f"case2 max abs err = {jnp.max(jnp.abs(logits2 - ref2))}"
    )

    print("KERNEL_OK")
</pallas_src>

<mosaic_0001>
module attributes {stable_mosaic.version = 11 : i64} {
  func.func @_isomax_kernel(%arg0: i32, %arg1: memref<1xf32, #tpu.memory_space<smem>>, %arg2: memref<8x128xf32, #tpu.memory_space<vmem>>, %arg3: memref<128x128xf32, #tpu.memory_space<vmem>>, %arg4: memref<8x128xf32, #tpu.memory_space<vmem>>) attributes {dimension_semantics = [#tpu.dimension_semantics<parallel>], iteration_bounds = array<i64: 1>, scalar_prefetch = 0 : i64, scratch_operands = 0 : i64, tpu.core_type = #tpu.core_type<tc>, window_params = [{transform_indices = @transform_0, window_bounds = array<i64: 1>}, {transform_indices = @transform_1, window_bounds = array<i64: 8, 128>}, {pipeline_mode = #tpu.pipeline_mode<synchronous>, transform_indices = @transform_2, window_bounds = array<i64: 128, 128>}, {transform_indices = @transform_3, window_bounds = array<i64: 8, 128>}]} {
    %c0 = arith.constant 0 : index
    %c0_0 = arith.constant 0 : index
    %0 = vector.load %arg2[%c0, %c0_0] : memref<8x128xf32, #tpu.memory_space<vmem>>, vector<8x128xf32>
    %1 = arith.mulf %0, %0 : vector<8x128xf32>
    %cst = arith.constant dense<0.000000e+00> : vector<8xf32>
    %2 = vector.multi_reduction <add>, %1, %cst [1] : vector<8x128xf32> to vector<8xf32>
    %3 = vector.shape_cast %2 : vector<8xf32> to vector<8x1xf32>
    %cst_1 = arith.constant 1.000000e-24 : f32
    %4 = vector.broadcast %cst_1 : f32 to vector<8x1xf32>
    %5 = arith.maximumf %3, %4 : vector<8x1xf32>
    %6 = math.rsqrt %5 : vector<8x1xf32>
    %7 = vector.broadcast %6 : vector<8x1xf32> to vector<8x128xf32>
    %8 = arith.mulf %0, %7 : vector<8x128xf32>
    %9 = arith.mulf %3, %6 : vector<8x1xf32>
    %10 = arith.mulf %9, %6 : vector<8x1xf32>
    %c0_2 = arith.constant 0 : index
    %c0_3 = arith.constant 0 : index
    %11 = vector.load %arg3[%c0_2, %c0_3] : memref<128x128xf32, #tpu.memory_space<vmem>>, vector<128x128xf32>
    %cst_4 = arith.constant dense<0.000000e+00> : vector<8x128xf32>
    %12 = tpu.matmul %8, %11, %cst_4 {dimension_numbers = #tpu.dot_dimension_numbers<[1], [1], [0], [0], [0, 0, 1, 0], [], []>} : vector<8x128xf32>, vector<128x128xf32>, vector<8x128xf32> -> vector<8x128xf32>
    %cst_5 = arith.constant 1.000000e+00 : f32
    %13 = vector.broadcast %cst_5 : f32 to vector<8x1xf32>
    %14 = arith.addf %10, %13 : vector<8x1xf32>
    %cst_6 = arith.constant 2.000000e+00 : f32
    %15 = vector.broadcast %cst_6 : f32 to vector<8x128xf32>
    %16 = arith.mulf %15, %12 : vector<8x128xf32>
    %17 = vector.broadcast %14 : vector<8x1xf32> to vector<8x128xf32>
    %18 = arith.subf %17, %16 : vector<8x128xf32>
    %cst_7 = arith.constant 0.000000e+00 : f32
    %19 = vector.broadcast %cst_7 : f32 to vector<8x128xf32>
    %20 = arith.maximumf %18, %19 : vector<8x128xf32>
    %21 = math.sqrt %20 : vector<8x128xf32>
    %c0_8 = arith.constant 0 : index
    %22 = memref.load %arg1[%c0_8] : memref<1xf32, #tpu.memory_space<smem>>
    %23 = math.absf %22 : f32
    %cst_9 = arith.constant -1.000000e+00 : f32
    %24 = arith.mulf %23, %cst_9 : f32
    %25 = vector.broadcast %24 : f32 to vector<8x128xf32>
    %26 = arith.mulf %25, %21 : vector<8x128xf32>
    %c0_10 = arith.constant 0 : index
    %c0_11 = arith.constant 0 : index
    %27 = vector.load %arg4[%c0_10, %c0_11] : memref<8x128xf32, #tpu.memory_space<vmem>>, vector<8x128xf32>
    tpu.vector_store %arg4[%c0_10, %c0_11], %26 {strides = array<i32>} : memref<8x128xf32, #tpu.memory_space<vmem>>, vector<8x128xf32>,
    return
  }
  func.func @transform_0(%arg0: i32) -> i32 {
    %c0_i32 = arith.constant 0 : i32
    %c0_i32_0 = arith.constant 0 : i32
    return %c0_i32 : i32
  }
  func.func @transform_1(%arg0: i32) -> (i32, i32) {
    %c0_i32 = arith.constant 0 : i32
    %c0_i32_0 = arith.constant 0 : i32
    return %arg0, %c0_i32 : i32, i32
  }
  func.func @transform_2(%arg0: i32) -> (i32, i32) {
    %c0_i32 = arith.constant 0 : i32
    %c0_i32_0 = arith.constant 0 : i32
    %c0_i32_1 = arith.constant 0 : i32
    return %c0_i32, %c0_i32_0 : i32, i32
  }
  func.func @transform_3(%arg0: i32) -> (i32, i32) {
    %c0_i32 = arith.constant 0 : i32
    %c0_i32_0 = arith.constant 0 : i32
    return %arg0, %c0_i32 : i32, i32
  }
}

</mosaic_0001>

<llo_original>
// kernel: tpu_custom_call.1
$region0: #{tpu_custom_call.1}
  #allocation0 [shape = 'u32[]', space=smem, size = 0x4, offset = 0x4, fixed_abs, tag = 'smem constant byte address 0x4 - core index']
  #allocation1 [shape = 'u32[144,128]{1,0:T(1,128)}', space=vmem, size = 0x12000, scoped, tag = 'internal scratch']
  #allocation2 [shape = 'f32[1]{0:T(128)S(6)}', space=smem, size = 0x200, scoped, tag = 'scoped memory for tpu_custom_call.1']
  %s0 = inlined_call_operand.<no memory space> [shape: f32[1], index: 0, kind: input, shape index: {}]
  %s1 = inlined_call_operand.hbm [shape: f32[8,128], index: 1, kind: input, shape index: {}]
  %s2 = inlined_call_operand.hbm [shape: f32[128,128], index: 2, kind: input, shape index: {}]
  %s3 = inlined_call_operand.hbm [shape: f32[8,128], index: 3, kind: output, shape index: {}]
  %s4 = sld [smem:[#allocation0]]
  $region30: #{tpu_custom_call.1} parent=0
    _
  %s6 = ssub.s32 1, %s4
  %s7 = scalar_select 0, %s6, %s4
  %8 = sst [smem:[#allocation2]] %s0
  $region1: #{tpu_custom_call.1} parent=0
    #allocation3 [shape = 'u8[4096]{0}', space=vmem, size = 0x1000, scoped, tag = 'input window, operand 1, single buffered']
    #allocation4 [shape = 's32[1]{0}', space=sflag, size = 0x4, scoped, tag = 'scoped memory for tpu_custom_call.1']
    #allocation5 [shape = 's32[1]{0}', space=sflag, size = 0x4, scoped, tag = 'scoped memory for tpu_custom_call.1']
    #allocation6 [shape = 'u8[65536]{0}', space=vmem, size = 0x10000, scoped, tag = 'input window, operand 2, single buffered']
    #allocation7 [shape = 's32[1]{0}', space=sflag, size = 0x4, scoped, tag = 'scoped memory for tpu_custom_call.1']
    #allocation8 [shape = 'u8[4096]{0}', space=vmem, size = 0x1000, scoped, tag = 'output window, operand 0, single buffered']
    %9 = vsyncpa [#allocation4], 0
    %10 = vsyncpa [#allocation7], 0
    %11 = vsyncpa [#allocation5], 0
    // Predicated region
    $region2: #{tpu_custom_call.1} parent=1 // pred_check
      _
    $region3: #{tpu_custom_call.1} parent=1 // pred_check_branch
      %13 = sbr.rel (0) target = $region5
    $region4: #{tpu_custom_call.1} parent=1 // pred_region
      _
    $region5: #{tpu_custom_call.1} parent=1 // pred_fallthru
      _
    // Predicated region
    $region6: #{tpu_custom_call.1} parent=1 // pred_check
      _
    $region7: #{tpu_custom_call.1} parent=1 // pred_check_branch
      %15 = sbr.rel (0) target = $region9
    $region8: #{tpu_custom_call.1} parent=1 // pred_region
      %s17 = ssub.s32 128, 128
      %18 = vsyncadd [#allocation4], %s17
      %s20 = sshll.u32 [#allocation3], 4
      %s21 = int_to_ptr.vmem [resolvable:$true] %s20
      %23 = dma.hbm_to_vmem [thread:$0]  %s1, 128, %s21, [#allocation4]
    $region9: #{tpu_custom_call.1} parent=1 // pred_fallthru
      _
    // Predicated region
    $region10: #{tpu_custom_call.1} parent=1 // pred_check
      _
    $region11: #{tpu_custom_call.1} parent=1 // pred_check_branch
      %25 = sbr.rel (0) target = $region13
    $region12: #{tpu_custom_call.1} parent=1 // pred_region
      %s27 = ssub.s32 2048, 2048
      %28 = vsyncadd [#allocation7], %s27
      %s29 = sshll.u32 [#allocation6], 4
      %s30 = int_to_ptr.vmem [resolvable:$true] %s29
      %35 = dma.hbm_to_vmem [thread:$0]  %s2, 2048, %s30, [#allocation7], 128, 128, 8
    $region13: #{tpu_custom_call.1} parent=1 // pred_fallthru
      _
    // Predicated region
    $region14: #{tpu_custom_call.1} parent=1 // pred_check
      _
    $region15: #{tpu_custom_call.1} parent=1 // pred_check_branch
      %37 = sbr.rel (0) target = $region17
    $region16: #{tpu_custom_call.1} parent=1 // pred_region
      %38 = dma.done [#allocation4], 128
    $region17: #{tpu_custom_call.1} parent=1 // pred_fallthru
      _
    // Predicated region
    $region18: #{tpu_custom_call.1} parent=1 // pred_check
      _
    $region19: #{tpu_custom_call.1} parent=1 // pred_check_branch
      %40 = sbr.rel (0) target = $region21
    $region20: #{tpu_custom_call.1} parent=1 // pred_region
      %41 = dma.done [#allocation7], 2048
    $region21: #{tpu_custom_call.1} parent=1 // pred_fallthru
      _
    %v42 = vld [vmem:[#allocation3] sm:$0xff]
    %v43 = vmul.f32 %v42, %v42
    %44 = vadd.xlane.f32.xlu0 %v43
    %v45 = vpop.xlane.xlu0 %44
    %v46 = vmax.f32 %v45, 1e-24
    %v47 = vrsqrt.pop %v46
    %v48 = vmul.f32 %v42, %v47
    %v49 = vmul.f32 %v45, %v47
    %v50 = vmul.f32 %v49, %v47
    %v51 = vld [vmem:[#allocation6] sm:$0xff]
    %v52 = vld [vmem:[#allocation6 + $0x8] sm:$0xff]
    %v53 = vld [vmem:[#allocation6 + $0x10] sm:$0xff]
    %v54 = vld [vmem:[#allocation6 + $0x18] sm:$0xff]
    %v55 = vld [vmem:[#allocation6 + $0x20] sm:$0xff]
    %v56 = vld [vmem:[#allocation6 + $0x28] sm:$0xff]
    %v57 = vld [vmem:[#allocation6 + $0x30] sm:$0xff]
    %v58 = vld [vmem:[#allocation6 + $0x38] sm:$0xff]
    %v59 = vld [vmem:[#allocation6 + $0x40] sm:$0xff]
    %v60 = vld [vmem:[#allocation6 + $0x48] sm:$0xff]
    %v61 = vld [vmem:[#allocation6 + $0x50] sm:$0xff]
    %v62 = vld [vmem:[#allocation6 + $0x58] sm:$0xff]
    %v63 = vld [vmem:[#allocation6 + $0x60] sm:$0xff]
    %v64 = vld [vmem:[#allocation6 + $0x68] sm:$0xff]
    %v65 = vld [vmem:[#allocation6 + $0x70] sm:$0xff]
    %v66 = vld [vmem:[#allocation6 + $0x78] sm:$0xff]
    %67 = vmatprep.subr.mxu0 0.0
    %68 = vmatpush1.xpose.msra.mxu0 %v51
    %69 = vmatprep.subr.mxu0 0.0
    %70 = vmatpush1.xpose.msra.mxu0 %v52
    %71 = vmatprep.subr.mxu0 0.0
    %72 = vmatpush1.xpose.msra.mxu0 %v53
    %73 = vmatprep.subr.mxu0 0.0
    %74 = vmatpush1.xpose.msra.mxu0 %v54
    %75 = vmatprep.subr.mxu0 0.0
    %76 = vmatpush1.xpose.msra.mxu0 %v55
    %77 = vmatprep.subr.mxu0 0.0
    %78 = vmatpush1.xpose.msra.mxu0 %v56
    %79 = vmatprep.subr.mxu0 0.0
    %80 = vmatpush1.xpose.msra.mxu0 %v57
    %81 = vmatprep.subr.mxu0 0.0
    %82 = vmatpush1.xpose.msra.mxu0 %v58
    %83 = vmatprep.subr.mxu0 0.0
    %84 = vmatpush1.xpose.msra.mxu0 %v59
    %85 = vmatprep.subr.mxu0 0.0
    %86 = vmatpush1.xpose.msra.mxu0 %v60
    %87 = vmatprep.subr.mxu0 0.0
    %88 = vmatpush1.xpose.msra.mxu0 %v61
    %89 = vmatprep.subr.mxu0 0.0
    %90 = vmatpush1.xpose.msra.mxu0 %v62
    %91 = vmatprep.subr.mxu0 0.0
    %92 = vmatpush1.xpose.msra.mxu0 %v63
    %93 = vmatprep.subr.mxu0 0.0
    %94 = vmatpush1.xpose.msra.mxu0 %v64
    %95 = vmatprep.subr.mxu0 0.0
    %96 = vmatpush1.xpose.msra.mxu0 %v65
    %97 = vmatprep.subr.mxu0 0.0
    %98 = vmatpush1.xpose.msra.mxu0 %v66
    %99 = vmatprep.subr.mxu0 0.0
    %100 = vmatpush1.xpose.msra.mxu0 0.0
    %101 = vmatprep.subr.mxu0 0.0
    %102 = vmatpush1.xpose.msra.mxu0 0.0
    %103 = vmatprep.subr.mxu0 0.0
    %104 = vmatpush1.xpose.msra.mxu0 0.0
    %105 = vmatprep.subr.mxu0 0.0
    %106 = vmatpush1.xpose.msra.mxu0 0.0
    %107 = vmatprep.subr.mxu0 0.0
    %108 = vmatpush1.xpose.msra.mxu0 0.0
    %109 = vmatprep.subr.mxu0 0.0
    %110 = vmatpush1.xpose.msra.mxu0 0.0
    %111 = vmatprep.subr.mxu0 0.0
    %112 = vmatpush1.xpose.msra.mxu0 0.0
    %113 = vmatprep.subr.mxu0 0.0
    %114 = vmatpush1.xpose.msra.mxu0 0.0
    %115 = vmatprep.subr.mxu0 0.0
    %116 = vmatpush1.xpose.msra.mxu0 0.0
    %117 = vmatprep.subr.mxu0 0.0
    %118 = vmatpush1.xpose.msra.mxu0 0.0
    %119 = vmatprep.subr.mxu0 0.0
    %120 = vmatpush1.xpose.msra.mxu0 0.0
    %121 = vmatprep.subr.mxu0 0.0
    %122 = vmatpush1.xpose.msra.mxu0 0.0
    %123 = vmatprep.subr.mxu0 0.0
    %124 = vmatpush1.xpose.msra.mxu0 0.0
    %125 = vmatprep.subr.mxu0 0.0
    %126 = vmatpush1.xpose.msra.mxu0 0.0
    %127 = vmatprep.subr.mxu0 0.0
    %128 = vmatpush1.xpose.msra.mxu0 0.0
    %129 = vmatprep.subr.mxu0 0.0
    %130 = vmatpush1.xpose.msra.mxu0 0.0
    %131 = vmatprep.mubr.f32.mxu0 0.0
    %132 = vmatmul.mubr.f32.gmra.mrb[0].mxu0 %v48
    %v133 = vpop.f32.mrb[0].mxu0
    %v134 = vadd.f32 0.0, %v133
    %v135 = vpop.f32.mrb[0].mxu0
    %136 = vdwg.mxu0
    %v137 = vadd.f32 %v50, 1.0
    %v138 = vmul.f32 %v134, 2.0
    %v139 = vsub.f32 %v137, %v138
    %v140 = vmax.f32 %v139, 0.0
    %v141 = vrsqrt.pop %v140
    %v142 = vmul.f32 %v140, %v141
    %vm143 = vcmp.eq.f32.partialorder %v140, inf
    %v144 = vsel %vm143, %v140, %v142
    %vm145 = vcmp.eq.f32.partialorder %v140, 0.0
    %v146 = vand.u32 %v140, 2147483648
    %v147 = vsel %vm145, %v146, %v144
    %s148 = sld [smem:[#allocation2]]
    %s149 = sand.u32 2147483647, %s148
    %s150 = smul.f32 %s149, -1.0
    %v151 = vstv %s150
    %v152 = vmul.f32 %v151, %v147
    %153 = vst [vmem:[#allocation8] sm:$0xff] %v152
    // Predicated region
    $region22: #{tpu_custom_call.1} parent=1 // pred_check
      _
    $region23: #{tpu_custom_call.1} parent=1 // pred_check_branch
      %155 = sbr.rel (0) target = $region25
    $region24: #{tpu_custom_call.1} parent=1 // pred_region
      %s157 = ssub.s32 128, 128
      %158 = vsyncadd [#allocation5], %s157
      %s160 = sshll.u32 [#allocation8], 4
      %s161 = int_to_ptr.vmem [resolvable:$true] %s160
      %163 = dma.vmem_to_hbm [thread:$0]  %s161, 128, %s3, [#allocation5]
    $region25: #{tpu_custom_call.1} parent=1 // pred_fallthru
      _
    // Predicated region
    $region26: #{tpu_custom_call.1} parent=1 // pred_check
      _
    $region27: #{tpu_custom_call.1} parent=1 // pred_check_branch
      %165 = sbr.rel (0) target = $region29
    $region28: #{tpu_custom_call.1} parent=1 // pred_region
      %166 = dma.done [#allocation5], 128
    $region29: #{tpu_custom_call.1} parent=1 // pred_fallthru
      _
    %167 = vsyncpa [#allocation4], 1
    %168 = vsyncpa [#allocation7], 1
    %169 = vsyncpa [#allocation5], 1

</llo_original>
